<compile_context>
chip_gen: v7x
topology: tpu7x:2x2x1
jax: 0.10.0
libtpu: 0.0.40
codegen_flags: <defaults>
</compile_context>

<pallas_src>
import functools

import jax
import jax.numpy as jnp
from jax.experimental import pallas as pl
from jax.experimental.pallas import tpu as pltpu


def _patch_embed_kernel(x_ref, w_ref, b_ref, o_ref):
    # x_ref: (tm, K) bf16 patch rows; w_ref: (K, N) bf16; b_ref: (1, N) f32.
    acc = jnp.dot(x_ref[...], w_ref[...], preferred_element_type=jnp.float32)
    o_ref[...] = (acc + b_ref[...]).astype(o_ref.dtype)


def _round_up(x: int, m: int) -> int:
    return ((x + m - 1) // m) * m


def _pick_tm(m: int) -> int:
    """M-tile: <= 512 rows, multiple of 8, >= 2 grid steps when possible."""
    if m <= 8:
        return m  # block == full dim; (8,128) tiling rule satisfied
    # 512-row tiles at large M; for small M split into (at least) two blocks so
    # the parallel grid axis can be sharded across v7x's two TensorCores.
    return min(512, _round_up((m + 1) // 2, 8))


@functools.partial(jax.jit, static_argnames=("patch", "compute_dtype"))
def patch_embed(x_nchw, weight, bias, *, patch, compute_dtype=jnp.bfloat16):
    """Equivalent of PatchEmbed.forward (Conv2d k==s, pad 0, then permute 0,2,3,1).

    Args:
      x_nchw: (B, C, H, W) input image.
      weight: (embed_dim, C, P, P) Conv2d weight (PyTorch layout).
      bias:   (embed_dim,) Conv2d bias.
      patch:  patch size P.
      compute_dtype: matmul operand dtype (accumulation is always f32).
    Returns:
      (B, H//P, W//P, embed_dim) patch embeddings, in x's dtype.
    """
    B, C, H, W = x_nchw.shape
    P = patch
    embed_dim = weight.shape[0]
    Hp, Wp = H // P, W // P
    K = C * P * P
    M = B * Hp * Wp

    # --- glue (XLA): extract non-overlapping patches as an (M, K) matrix and
    # cast to the compute dtype.  allow_input_fusion below lets XLA fuse this
    # permute + convert into the pallas_call input path.
    patches = x_nchw.reshape(B, C, Hp, P, Wp, P)
    patches = patches.transpose(0, 2, 4, 1, 3, 5).reshape(M, K)
    patches = patches.astype(compute_dtype)

    # Conv2d weight (N, C, P, P) -> (K, N); the (C, P, P) flatten order matches
    # the patch flatten order above.  Permuting the tiny weight is a one-off.
    w2d = weight.reshape(embed_dim, K).T.astype(compute_dtype)
    b2d = bias.reshape(1, embed_dim).astype(jnp.float32)  # bias add stays f32

    tm = _pick_tm(M)
    grid = (pl.cdiv(M, tm),)  # partial last block handled by Pallas masking

    # VMEM budget: double-buffered x/out tiles + weight + bias, with headroom.
    itemsize = jnp.dtype(compute_dtype).itemsize
    out_itemsize = jnp.dtype(x_nchw.dtype).itemsize
    vmem_need = (
        2 * tm * K * itemsize            # x tile, double-buffered
        + 2 * K * embed_dim * itemsize   # weight (resident, 2 bufs allocated)
        + 2 * embed_dim * 4              # bias
        + 2 * tm * embed_dim * out_itemsize  # out tile, double-buffered
    )
    vmem_limit = min(max(2 * vmem_need, 16 * 1024 * 1024), 48 * 1024 * 1024)

    out = pl.pallas_call(
        _patch_embed_kernel,
        out_shape=jax.ShapeDtypeStruct((M, embed_dim), x_nchw.dtype),
        grid_spec=pltpu.PrefetchScalarGridSpec(
            num_scalar_prefetch=0,
            grid=grid,
            in_specs=[
                pl.BlockSpec((tm, K), lambda i: (i, 0)),
                # Weight / bias: constant index map -> stay resident across grid.
                pl.BlockSpec((K, embed_dim), lambda i: (0, 0)),
                pl.BlockSpec((1, embed_dim), lambda i: (0, 0)),
            ],
            out_specs=pl.BlockSpec((tm, embed_dim), lambda i: (i, 0)),
        ),
        compiler_params=pltpu.CompilerParams(
            dimension_semantics=("parallel",),        # megacore-shard the M axis
            vmem_limit_bytes=vmem_limit,
            allow_input_fusion=[True, False, False],  # fuse patch permute into input
        ),
    )(patches, w2d, b2d)

    return out.reshape(B, Hp, Wp, embed_dim)


def _reference(x_nchw, weight, bias, patch):
    """Pure-JAX f32 reference (strided conv == patch matmul + permute)."""
    B, C, H, W = x_nchw.shape
    P = patch
    embed_dim = weight.shape[0]
    Hp, Wp = H // P, W // P
    patches = x_nchw.reshape(B, C, Hp, P, Wp, P).transpose(0, 2, 4, 1, 3, 5)
    patches = patches.reshape(B, Hp, Wp, C * P * P).astype(jnp.float32)
    w2d = weight.reshape(embed_dim, C * P * P).T.astype(jnp.float32)
    return patches @ w2d + bias[None, None, None, :].astype(jnp.float32)


if __name__ == "__main__":
    # Small shapes consistent with PatchEmbed: patch=8, in_chans=3, embed_dim=128.
    B, C, H, W = 2, 3, 32, 32
    P = 8
    embed_dim = 128

    key = jax.random.PRNGKey(0)
    kx, kw, kb = jax.random.split(key, 3)
    x = jax.random.normal(kx, (B, C, H, W), dtype=jnp.float32)
    weight = jax.random.normal(kw, (embed_dim, C, P, P), dtype=jnp.float32) * 0.02
    bias = jax.random.normal(kb, (embed_dim,), dtype=jnp.float32) * 0.02

    out = patch_embed(x, weight, bias, patch=P)
    out = jax.block_until_ready(out)

    ref = _reference(x, weight, bias, P)
    assert out.shape == (B, H // P, W // P, embed_dim), out.shape
    assert out.dtype == x.dtype, out.dtype
    # bf16 operands with f32 accumulation -> loose-ish tolerance vs f32 reference.
    assert jnp.allclose(out, ref, atol=2e-2, rtol=2e-2), "mismatch vs reference"

    print("KERNEL_OK")
</pallas_src>

<mosaic_0001>
module attributes {stable_mosaic.version = 11 : i64} {
  func.func @_patch_embed_kernel(%arg0: i32, %arg1: memref<16x192xbf16, #tpu.memory_space<vmem>>, %arg2: memref<192x128xbf16, #tpu.memory_space<vmem>>, %arg3: memref<1x128xf32, #tpu.memory_space<vmem>>, %arg4: memref<16x128xf32, #tpu.memory_space<vmem>>) attributes {dimension_semantics = [#tpu.dimension_semantics<parallel>], iteration_bounds = array<i64: 2>, scalar_prefetch = 0 : i64, scratch_operands = 0 : i64, tpu.core_type = #tpu.core_type<tc>, window_params = [{transform_indices = @transform_0, window_bounds = array<i64: 16, 192>}, {pipeline_mode = #tpu.pipeline_mode<synchronous>, transform_indices = @transform_1, window_bounds = array<i64: 192, 128>}, {pipeline_mode = #tpu.pipeline_mode<synchronous>, transform_indices = @transform_2, window_bounds = array<i64: 1, 128>}, {transform_indices = @transform_3, window_bounds = array<i64: 16, 128>}]} {
    %c0 = arith.constant 0 : index
    %c0_0 = arith.constant 0 : index
    %0 = vector.load %arg1[%c0, %c0_0] : memref<16x192xbf16, #tpu.memory_space<vmem>>, vector<16x192xbf16>
    %c0_1 = arith.constant 0 : index
    %c0_2 = arith.constant 0 : index
    %1 = vector.load %arg2[%c0_1, %c0_2] : memref<192x128xbf16, #tpu.memory_space<vmem>>, vector<192x128xbf16>
    %cst = arith.constant dense<0.000000e+00> : vector<16x128xf32>
    %2 = tpu.matmul %0, %1, %cst {dimension_numbers = #tpu.dot_dimension_numbers<[1], [0], [0], [1], [0, 0, 1, 1], [], []>} : vector<16x192xbf16>, vector<192x128xbf16>, vector<16x128xf32> -> vector<16x128xf32>
    %c0_3 = arith.constant 0 : index
    %c0_4 = arith.constant 0 : index
    %3 = vector.load %arg3[%c0_3, %c0_4] : memref<1x128xf32, #tpu.memory_space<vmem>>, vector<1x128xf32>
    %4 = vector.broadcast %3 : vector<1x128xf32> to vector<16x128xf32>
    %5 = arith.addf %2, %4 : vector<16x128xf32>
    %c0_5 = arith.constant 0 : index
    %c0_6 = arith.constant 0 : index
    %6 = vector.load %arg4[%c0_5, %c0_6] : memref<16x128xf32, #tpu.memory_space<vmem>>, vector<16x128xf32>
    tpu.vector_store %arg4[%c0_5, %c0_6], %5 {strides = array<i32>} : memref<16x128xf32, #tpu.memory_space<vmem>>, vector<16x128xf32>,
    return
  }
  func.func @transform_0(%arg0: i32) -> (i32, i32) {
    %c0_i32 = arith.constant 0 : i32
    %c0_i32_0 = arith.constant 0 : i32
    return %arg0, %c0_i32 : i32, i32
  }
  func.func @transform_1(%arg0: i32) -> (i32, i32) {
    %c0_i32 = arith.constant 0 : i32
    %c0_i32_0 = arith.constant 0 : i32
    %c0_i32_1 = arith.constant 0 : i32
    return %c0_i32, %c0_i32_0 : i32, i32
  }
  func.func @transform_2(%arg0: i32) -> (i32, i32) {
    %c0_i32 = arith.constant 0 : i32
    %c0_i32_0 = arith.constant 0 : i32
    %c0_i32_1 = arith.constant 0 : i32
    return %c0_i32, %c0_i32_0 : i32, i32
  }
  func.func @transform_3(%arg0: i32) -> (i32, i32) {
    %c0_i32 = arith.constant 0 : i32
    %c0_i32_0 = arith.constant 0 : i32
    return %arg0, %c0_i32 : i32, i32
  }
}

</mosaic_0001>

<llo_original>
// kernel: patch_embed.1
$region0: #{patch_embed.1}
  #allocation0 [shape = 'u32[]', space=smem, size = 0x4, offset = 0x4, fixed_abs, tag = 'smem constant byte address 0x4 - core index']
  #allocation1 [shape = 'u32[144,128]{1,0:T(1,128)}', space=vmem, size = 0x12000, scoped, tag = 'internal scratch']
  %s0 = inlined_call_operand.vmem [shape: bf16[32,192], index: 0, kind: input, shape index: {}]
  %s1 = inlined_call_operand.vmem [shape: bf16[192,128], index: 1, kind: input, shape index: {}]
  %s2 = inlined_call_operand.vmem [shape: f32[1,128], index: 2, kind: input, shape index: {}]
  %s3 = inlined_call_operand.hbm [shape: f32[32,128], index: 3, kind: output, shape index: {}]
  %s4 = sld [smem:[#allocation0]]
  $region45: #{patch_embed.1} parent=0
    _
  %s6 = ssub.s32 1, %s4
  %s7 = scalar_select 0, %s6, %s4
  $region1: #{patch_embed.1} parent=0
    #allocation2 [shape = 'u8[16384]{0}', space=vmem, size = 0x4000, scoped, tag = 'output window, operand 0']
    #allocation3 [shape = 's32[2]{0}', space=sflag, size = 0x8, scoped, tag = 'scoped memory for patch_embed.1']
    %8 = vsyncpa [#allocation3], 0
    %s9 = scalar_lea.sflag [#allocation3], 1
    %10 = vsyncpa %s9, 0
    loop: start=0, step=1, limit=4
    $region2: #{patch_embed.1} parent=1 // loop_pre_header
      _
    $region3: #{patch_embed.1} parent=1 // loop_header
      %s12 = sphi 0, %s16
      %p13 = scmp.ge.s32.totalorder %s12, 4
      %s22 = sphi 0, %s24
      %s25 = sphi 0, %s22
      %s26 = sphi 0, %s25
      %s42 = sphi 0, %s26
      %s46 = sphi 0, %s46
      %s48 = sphi 0, %s46
      %s49 = sphi 0, %s48
      %s63 = sphi 0, %s49
      %s67 = sphi 0, %s67
      %s69 = sphi 0, %s67
      %s70 = sphi 0, %s69
      %s84 = sphi 0, %s70
      %s90 = sphi 0, %s92
      %s93 = sphi 0, %s90
      %s94 = sphi 0, %s93
      %s110 = sphi 0, %s94
    $region4: #{patch_embed.1} parent=1 // loop_header_branch
      %15 = sbr.rel (%p13) target = $region8
    $region5: #{patch_embed.1} parent=1 // loop_body
      %s17 = ssub.s32 %s12, 1
      %s18 = ssub.s32 %s12, 2
      %s19 = sadd.s32 %s12, 1
      %s20 = ssub.s32 %s12, %s19
      %p21 = scmp.eq.s32.totalorder %s20, 0
      %s23 = sadd.s32 %s22, 1
      %s24 = scalar_select %p21, %s22, %s23
      %p27 = pneg %p21
      %p28 = scmp.eq.s32.totalorder %s12, 1
      %p29 = por %p27, %p28
      %p30 = scmp.ne.s32.totalorder %s22, %s25
      %p31 = scmp.eq.s32.totalorder %s12, 0
      %p32 = por %p30, %p31
      %p33 = scmp.ne.s32.totalorder %s22, %s25
      %p34 = scmp.eq.s32.totalorder %s17, 1
      %p35 = por %p33, %p34
      %p36 = scmp.ne.s32.totalorder %s25, %s26
      %p37 = scmp.eq.s32.totalorder %s17, 0
      %p38 = por %p36, %p37
      %p39 = scmp.ne.s32.totalorder %s25, %s26
      %p40 = scmp.eq.s32.totalorder %s18, 1
      %p41 = por %p39, %p40
      %p43 = scmp.ne.s32.totalorder %s26, %s42
      %p44 = scmp.eq.s32.totalorder %s18, 0
      %p45 = por %p43, %p44
      %s47 = sadd.s32 %s46, 1
      %p50 = scmp.eq.s32.totalorder %s12, 1
      %p51 = scmp.ne.s32.totalorder %s46, %s48
      %p52 = scmp.eq.s32.totalorder %s12, 0
      %p53 = por %p51, %p52
      %p54 = scmp.ne.s32.totalorder %s46, %s48
      %p55 = scmp.eq.s32.totalorder %s17, 1
      %p56 = por %p54, %p55
      %p57 = scmp.ne.s32.totalorder %s48, %s49
      %p58 = scmp.eq.s32.totalorder %s17, 0
      %p59 = por %p57, %p58
      %p60 = scmp.ne.s32.totalorder %s48, %s49
      %p61 = scmp.eq.s32.totalorder %s18, 1
      %p62 = por %p60, %p61
      %p64 = scmp.ne.s32.totalorder %s49, %s63
      %p65 = scmp.eq.s32.totalorder %s18, 0
      %p66 = por %p64, %p65
      %s68 = sadd.s32 %s67, 1
      %p71 = scmp.eq.s32.totalorder %s12, 1
      %p72 = scmp.ne.s32.totalorder %s67, %s69
      %p73 = scmp.eq.s32.totalorder %s12, 0
      %p74 = por %p72, %p73
      %p75 = scmp.ne.s32.totalorder %s67, %s69
      %p76 = scmp.eq.s32.totalorder %s17, 1
      %p77 = por %p75, %p76
      %p78 = scmp.ne.s32.totalorder %s69, %s70
      %p79 = scmp.eq.s32.totalorder %s17, 0
      %p80 = por %p78, %p79
      %p81 = scmp.ne.s32.totalorder %s69, %s70
      %p82 = scmp.eq.s32.totalorder %s18, 1
      %p83 = por %p81, %p82
      %p85 = scmp.ne.s32.totalorder %s70, %s84
      %p86 = scmp.eq.s32.totalorder %s18, 0
      %p87 = por %p85, %p86
      %s88 = ssub.s32 %s12, %s19
      %p89 = scmp.eq.s32.totalorder %s88, 0
      %s91 = sadd.s32 %s90, 1
      %s92 = scalar_select %p89, %s90, %s91
      %p95 = pneg %p89
      %p96 = scmp.eq.s32.totalorder %s12, 1
      %p97 = por %p95, %p96
      %p98 = scmp.ne.s32.totalorder %s90, %s93
      %p99 = scmp.eq.s32.totalorder %s12, 0
      %p100 = por %p98, %p99
      %p101 = scmp.ne.s32.totalorder %s90, %s93
      %p102 = scmp.eq.s32.totalorder %s17, 1
      %p103 = por %p101, %p102
      %p104 = scmp.ne.s32.totalorder %s93, %s94
      %p105 = scmp.eq.s32.totalorder %s17, 0
      %p106 = por %p104, %p105
      %p107 = scmp.ne.s32.totalorder %s93, %s94
      %p108 = scmp.eq.s32.totalorder %s18, 1
      %p109 = por %p107, %p108
      %p111 = scmp.ne.s32.totalorder %s94, %s110
      %p112 = scmp.eq.s32.totalorder %s18, 0
      %p113 = por %p111, %p112
      %p114 = scmp.le.s32.totalorder 1, %s12
      %p115 = scmp.lt.s32.totalorder %s12, 3
      %p116 = pnand %p114, %p115
      %p117 = pneg %p116
      // Predicated region
      $region9: #{patch_embed.1} parent=5 // pred_check
        _
      $region10: #{patch_embed.1} parent=5 // pred_check_branch
        %119 = sbr.rel (%p116) target = $region12
      $region11: #{patch_embed.1} parent=5 // pred_region
        %s120 = ssub.s32 %s12, 1
        // Predicated region
        $region13: #{patch_embed.1} parent=11 // pred_check
          %p121 = pneg %p59
        $region14: #{patch_embed.1} parent=11 // pred_check_branch
          %123 = sbr.rel (%p121) target = $region16
        $region15: #{patch_embed.1} parent=11 // pred_region
          _
        $region16: #{patch_embed.1} parent=11 // pred_fallthru
          _
        // Predicated region
        $region17: #{patch_embed.1} parent=11 // pred_check
          %p124 = pneg %p80
        $region18: #{patch_embed.1} parent=11 // pred_check_branch
          %126 = sbr.rel (%p124) target = $region20
        $region19: #{patch_embed.1} parent=11 // pred_region
          _
        $region20: #{patch_embed.1} parent=11 // pred_fallthru
          _
      $region12: #{patch_embed.1} parent=5 // pred_fallthru
        _
      %p127 = scmp.lt.s32.totalorder %s12, 2
      // Predicated region
      $region21: #{patch_embed.1} parent=5 // pred_check
        %p128 = pneg %p127
      $region22: #{patch_embed.1} parent=5 // pred_check_branch
        %130 = sbr.rel (%p128) target = $region24
      $region23: #{patch_embed.1} parent=5 // pred_region
        // Predicated region
        $region25: #{patch_embed.1} parent=23 // pred_check
          %p131 = pneg %p32
        $region26: #{patch_embed.1} parent=23 // pred_check_branch
          %133 = sbr.rel (%p131) target = $region28
        $region27: #{patch_embed.1} parent=23 // pred_region
          %s134 = smul.u32 2, %s12
          %p135 = scmp.lt.s32.totalorder %s134, 3
          %s136 = scalar_select %p135, %s134, 3
          %s137 = smul.addr %s136, 2
          %s138 = smul.addr %s137, 4
          %s139 = scalar_lea.vmem %s0, %s138
          %s140 = smul.u32 2, %s12
        $region28: #{patch_embed.1} parent=23 // pred_fallthru
          _
      $region24: #{patch_embed.1} parent=5 // pred_fallthru
        _
      %p141 = scmp.le.s32.totalorder 1, %s12
      %p142 = scmp.lt.s32.totalorder %s12, 3
      %p143 = pnand %p141, %p142
      %p144 = pneg %p143
      // Predicated region
      $region29: #{patch_embed.1} parent=5 // pred_check
        _
      $region30: #{patch_embed.1} parent=5 // pred_check_branch
        %146 = sbr.rel (%p143) target = $region32
      $region31: #{patch_embed.1} parent=5 // pred_region
        %s147 = ssub.s32 %s12, 1
        %s148 = smul.u32 2, %s17
        %p149 = scmp.lt.s32.totalorder %s148, 3
        %s150 = scalar_select %p149, %s148, 3
        %s151 = smul.addr %s150, 2
        %s152 = smul.addr %s151, 4
        %s153 = scalar_lea.vmem %s0, %s152
        %p154 = pneg %p38
        %p155 = pneg %p35
        %p156 = pneg %p59
        %p157 = pneg %p56
        %p158 = pneg %p80
        %p159 = pneg %p77
        %p160 = pneg %p106
        %p161 = pneg %p103
        %s162 = sand.u32 %s93, 1
        %s163 = scalar_lea.sflag [#allocation3], %s162
        %s164 = sand.u32 %s93, 1
        %s165 = smul.addr %s164, 16
        %s166 = scalar_lea.vmem [#allocation2], %s165
        %s167 = smul.u32 2, %s17
        %p168 = scmp.lt.s32.totalorder %s167, 3
        %s169 = scalar_select %p168, %s167, 3
        %s170 = smul.addr %s169, 2
        %s171 = smul.addr %s170, 4
        %s172 = scalar_lea.vmem %s0, %s171
        %s173 = smul.u32 2, %s17
        %s174 = smul.u32 2, %s17
        %v176 = vld [vmem:[%s172] sm:$0xff]
        %v177 = vld [vmem:[%s172 + $0x8] sm:$0xff]
        %v178 = vld [vmem:[%s1] sm:$0xf]
        %v179 = vld [vmem:[%s1 + $0x4] sm:$0xf]
        %v180 = vld [vmem:[%s1 + $0x8] sm:$0xf]
        %v181 = vld [vmem:[%s1 + $0xc] sm:$0xf]
        %v182 = vld [vmem:[%s1 + $0x10] sm:$0xf]
        %v183 = vld [vmem:[%s1 + $0x14] sm:$0xf]
        %v184 = vld [vmem:[%s1 + $0x18] sm:$0xf]
        %v185 = vld [vmem:[%s1 + $0x1c] sm:$0xf]
        %v186 = vld [vmem:[%s1 + $0x20] sm:$0xf]
        %v187 = vld [vmem:[%s1 + $0x24] sm:$0xf]
        %v188 = vld [vmem:[%s1 + $0x28] sm:$0xf]
        %v189 = vld [vmem:[%s1 + $0x2c] sm:$0xf]
        %v190 = vld [vmem:[%s1 + $0x30] sm:$0xf]
        %v191 = vld [vmem:[%s1 + $0x34] sm:$0xf]
        %v192 = vld [vmem:[%s1 + $0x38] sm:$0xf]
        %v193 = vld [vmem:[%s1 + $0x3c] sm:$0xf]
        %v194 = vld [vmem:[%s1 + $0x40] sm:$0xf]
        %v195 = vld [vmem:[%s1 + $0x44] sm:$0xf]
        %v196 = vld [vmem:[%s1 + $0x48] sm:$0xf]
        %v197 = vld [vmem:[%s1 + $0x4c] sm:$0xf]
        %v198 = vld [vmem:[%s1 + $0x50] sm:$0xf]
        %v199 = vld [vmem:[%s1 + $0x54] sm:$0xf]
        %v200 = vld [vmem:[%s1 + $0x58] sm:$0xf]
        %v201 = vld [vmem:[%s1 + $0x5c] sm:$0xf]
        %v202 = vld [vmem:[%s2] sm:$0x1]
        %v204 = vlaneseq
        %v205 = vshrl.u32 %v204, 7
        %v206 = vsub.s32 0, %v205
        %v207 = vrot.slane %v202, %v206
        %v211 = vunpack.c.l.b16 %v176
        %v212 = vunpack.c.h.b16 %v176
        %v213 = vunpack.c.l.b16 %v177
        %v214 = vunpack.c.h.b16 %v177
        %v215 = vpack.c.b16 %v213, %v211
        %v216 = vpack.c.b16 %v214, %v212
        %v242 = vunpack.c.l.b16 %v178
        %v243 = vunpack.c.l.b16 %v179
        %v244 = vunpack.c.l.b16 %v180
        %v245 = vunpack.c.l.b16 %v181
        %v246 = vunpack.c.l.b16 %v182
        %v247 = vunpack.c.l.b16 %v183
        %v248 = vunpack.c.l.b16 %v184
        %v249 = vunpack.c.l.b16 %v185
        %v250 = vunpack.c.l.b16 %v186
        %v251 = vunpack.c.l.b16 %v187
        %v252 = vunpack.c.l.b16 %v188
        %v253 = vunpack.c.l.b16 %v189
        %v254 = vunpack.c.l.b16 %v190
        %v255 = vunpack.c.l.b16 %v191
        %v256 = vunpack.c.l.b16 %v192
        %v257 = vunpack.c.l.b16 %v193
        %v258 = vunpack.c.l.b16 %v194
        %v259 = vunpack.c.l.b16 %v195
        %v260 = vunpack.c.l.b16 %v196
        %v261 = vunpack.c.l.b16 %v197
        %v262 = vunpack.c.l.b16 %v198
        %v263 = vunpack.c.l.b16 %v199
        %v264 = vunpack.c.l.b16 %v200
        %v265 = vunpack.c.l.b16 %v201
        %v266 = vpack.c.b16 %v243, %v242
        %v267 = vpack.c.b16 %v245, %v244
        %v268 = vpack.c.b16 %v247, %v246
        %v269 = vpack.c.b16 %v249, %v248
        %v270 = vpack.c.b16 %v251, %v250
        %v271 = vpack.c.b16 %v253, %v252
        %v272 = vpack.c.b16 %v255, %v254
        %v273 = vpack.c.b16 %v257, %v256
        %v274 = vpack.c.b16 %v259, %v258
        %v275 = vpack.c.b16 %v261, %v260
        %v276 = vpack.c.b16 %v263, %v262
        %v277 = vpack.c.b16 %v265, %v264
        %vm290 = vcmask 523264
        %v292 = vsel %vm290, %v216, 0
        %294 = vmatprep.subr.bf16.mxu0 0
        %295 = vmatpush1.bf16.msra.mxu0 %v266
        %296 = vmatprep.subr.bf16.mxu0 0
        %297 = vmatpush1.bf16.msra.mxu0 %v267
        %298 = vmatprep.subr.bf16.mxu0 0
        %299 = vmatpush1.bf16.msra.mxu0 %v268
        %300 = vmatprep.subr.bf16.mxu0 0
        %301 = vmatpush1.bf16.msra.mxu0 %v269
        %302 = vmatprep.subr.bf16.mxu0 0
        %303 = vmatpush1.bf16.msra.mxu0 %v270
        %304 = vmatprep.subr.bf16.mxu0 0
        %305 = vmatpush1.bf16.msra.mxu0 %v271
        %306 = vmatprep.subr.bf16.mxu0 0
        %307 = vmatpush1.bf16.msra.mxu0 %v272
        %308 = vmatprep.subr.bf16.mxu0 0
        %309 = vmatpush1.bf16.msra.mxu0 %v273
        %310 = vmatprep.subr.bf16.mxu0 0
        %311 = vmatpush1.bf16.msra.mxu0 %v274
        %312 = vmatprep.subr.bf16.mxu0 0
        %313 = vmatpush1.bf16.msra.mxu0 %v275
        %314 = vmatprep.subr.bf16.mxu0 0
        %315 = vmatpush1.bf16.msra.mxu0 %v276
        %316 = vmatprep.subr.bf16.mxu0 0
        %317 = vmatpush1.bf16.msra.mxu0 %v277
        %318 = vmatprep.subr.bf16.mxu0 0
        %319 = vmatpush1.bf16.msra.mxu0 0
        %320 = vmatprep.subr.bf16.mxu0 0
        %321 = vmatpush1.bf16.msra.mxu0 0
        %322 = vmatprep.subr.bf16.mxu0 0
        %323 = vmatpush1.bf16.msra.mxu0 0
        %324 = vmatprep.subr.bf16.mxu0 0
        %325 = vmatpush1.bf16.msra.mxu0 0
        %326 = vmatprep.mubr.bf16.mxu0 %v292
        %327 = vmatmul.mubr.bf16.gmra.mrb[0].mxu0 %v215
        %v328 = vpop.f32.mrb[0].mxu0
        %v329 = vadd.f32 %v207, %v328
        %v330 = vpop.f32.mrb[0].mxu0
        %v331 = vpop.f32.mrb[0].mxu0
        %v332 = vadd.f32 %v207, %v331
        %v333 = vpop.f32.mrb[0].mxu0
        %334 = vdwg.mxu0
        %335 = vst [vmem:[%s166] sm:$0xff] %v329
        %336 = vst [vmem:[%s166 + $0x8] sm:$0xff] %v332
        %s337 = sand.u32 %s93, 1
        %s338 = scalar_lea.sflag [#allocation3], %s337
        %s339 = sand.u32 %s93, 1
        %s340 = smul.addr %s339, 16
        %s341 = scalar_lea.vmem [#allocation2], %s340
        // Predicated region
        $region33: #{patch_embed.1} parent=31 // pred_check
          %p342 = pneg %p103
        $region34: #{patch_embed.1} parent=31 // pred_check_branch
          %344 = sbr.rel (%p342) target = $region36
        $region35: #{patch_embed.1} parent=31 // pred_region
          %s345 = smul.u32 2, %s17
          %s347 = ssub.s32 256, 256
          %348 = vsyncadd %s338, %s347
          %s349 = smul.addr %s345, 128
          %s350 = scalar_lea.hbm %s3, %s349
          %s351 = sshll.u32 %s341, 4
          %s352 = int_to_ptr.vmem [resolvable:$true] %s351
          %357 = dma.vmem_to_hbm [thread:$0]  %s352, 256, %s350, %s338, 128, 128, 8
        $region36: #{patch_embed.1} parent=31 // pred_fallthru
          _
      $region32: #{patch_embed.1} parent=5 // pred_fallthru
        _
      %p358 = scmp.le.s32.totalorder 2, %s12
      // Predicated region
      $region37: #{patch_embed.1} parent=5 // pred_check
        %p359 = pneg %p358
      $region38: #{patch_embed.1} parent=5 // pred_check_branch
        %361 = sbr.rel (%p359) target = $region40
      $region39: #{patch_embed.1} parent=5 // pred_region
        %s362 = ssub.s32 %s12, 2
        // Predicated region
        $region41: #{patch_embed.1} parent=39 // pred_check
          %p363 = pneg %p109
        $region42: #{patch_embed.1} parent=39 // pred_check_branch
          %365 = sbr.rel (%p363) target = $region44
        $region43: #{patch_embed.1} parent=39 // pred_region
          %s366 = sand.u32 %s94, 1
          %s367 = scalar_lea.sflag [#allocation3], %s366
          %s368 = sand.u32 %s94, 1
          %s369 = smul.addr %s368, 16
          %s370 = scalar_lea.vmem [#allocation2], %s369
          %371 = dma.done %s367, 256
        $region44: #{patch_embed.1} parent=39 // pred_fallthru
          _
      $region40: #{patch_embed.1} parent=5 // pred_fallthru
        _
    $region6: #{patch_embed.1} parent=1 // loop_footer
      %s16 = sadd.s32 1, %s12
    $region7: #{patch_embed.1} parent=1 // loop_footer_branch
      %11 = sbr.rel target = $region3
    $region8: #{patch_embed.1} parent=1 // loop_exit
      _
    %372 = vsyncpa [#allocation3], 1
    %s373 = scalar_lea.sflag [#allocation3], 1
    %374 = vsyncpa %s373, 1

</llo_original>
